<compile_context>
chip_gen: v6e
topology: v6e:2x2x1
jax: 0.10.0
libtpu: 0.0.40
codegen_flags: <defaults>
</compile_context>

<pallas_src>
import functools
import math

import jax
import jax.numpy as jnp
from jax.experimental import pallas as pl
from jax.experimental.pallas import tpu as pltpu

SLICE_LIMIT = 128          # the `0:128` slice in the PyTorch module
_LANE = 128                # TPU lane width


# --------------------------------------------------------------------------
# Generation-aware VMEM budgets.
# --------------------------------------------------------------------------
def _vmem_budgets():
    """Return (single-buffer per-step byte budget, vmem_limit_bytes)."""
    try:
        cap = int(pltpu.get_tpu_info().vmem_capacity_bytes)
    except Exception:
        cap = 64 * 1024 * 1024           # conservative: assume v7x-sized VMEM
    vmem_limit = (cap * 3) // 4          # leave headroom for Mosaic scratch
    if cap <= 64 * 1024 * 1024:          # v7x: 64 MiB physical per TensorCore
        step_budget = 14 * 1024 * 1024   # ~28 MiB double-buffered < 48 MiB limit
    else:                                # v5e / v6e: 128 MiB physical
        step_budget = 36 * 1024 * 1024   # ~72 MiB double-buffered < 96 MiB limit
    return step_budget, vmem_limit


def _divisors(total):
    ds = set()
    i = 1
    while i * i <= total:
        if total % i == 0:
            ds.add(i)
            ds.add(total // i)
        i += 1
    return ds


def _pick_hw_tile(hw, bytes_per_lane, step_budget, min_tile=_LANE):
    """Lane-tile choice.

    If the whole lane axis fits in the step budget, take it (full-dim blocks
    are exempt from the 128-divisibility rule).  Otherwise take the largest
    128-multiple that fits; the ragged edge tile is masked by Pallas, so the
    tile does not have to divide hw.
    """
    cap = (step_budget // max(bytes_per_lane, 1)) // _LANE * _LANE
    cap = max(cap, min_tile, _LANE)
    if hw <= cap:
        return hw
    return cap


def _pick_batch_block(n, bytes_per_batch_row, num_hw, step_budget, min_steps=4):
    """Fold batch elements into one grid step, but keep >= min_steps total grid
    steps so double-buffering overlaps reads/writes and (on v7x) both
    TensorCores get work."""
    fits = [d for d in _divisors(n) if d * bytes_per_batch_row <= step_budget]
    if not fits:
        return 1
    keeps_steps = [d for d in fits if (n // d) * num_hw >= min_steps]
    return max(keeps_steps) if keeps_steps else min(fits)


def _pick_channel_tile(c1, c2, hw_tile, itemsize, step_budget):
    """Largest channel tile cc with cc | c1, cc | c2 and sublane-pack alignment
    such that the three blocks (x1, x2, out) fit the step budget."""
    sub = max(8, 32 // itemsize)         # f32 -> 8, bf16 -> 16, int8 -> 32
    g = math.gcd(c1, c2)
    per_chan = 3 * hw_tile * itemsize
    cands = [d for d in _divisors(g)
             if d % sub == 0 and d * per_chan <= step_budget]
    return max(cands) if cands else None


# --------------------------------------------------------------------------
# Kernels.
# --------------------------------------------------------------------------
def _cat_slice_cat_kernel(x1_ref, x2_ref, o_ref, *, c1, c2, p1, p2):
    """out = [x1 | x2 | x1[:, :p1] | x2[:, :p2]] along the channel axis.

    Refs are (nb, C, hw_tile).  All slice boundaries are static Python ints,
    so every store is a plain rectangular VMEM store; the duplicated 128-ch
    slab reuses the already-resident x1/x2 blocks (no extra HBM reads).
    """
    o_ref[:, 0:c1, :] = x1_ref[...]
    o_ref[:, c1:c1 + c2, :] = x2_ref[...]
    o_ref[:, c1 + c2:c1 + c2 + p1, :] = x1_ref[:, 0:p1, :]
    if p2 > 0:
        o_ref[:, c1 + c2 + p1:c1 + c2 + p1 + p2, :] = x2_ref[:, 0:p2, :]
    # TODO(synk): for bf16/int8 inputs whose channel offsets are not multiples
    # of the sublane packing (16/32), these stores lower to masked/shifted
    # sublane stores; pad c1 in the wrapper if that path ever matters.


def _channel_tiled_kernel(x1_ref, x2_ref, o_ref, *, n1, nv):
    """Channel-tiled fallback: each grid step copies one cc-channel block of
    the output from the matching block of x1 or x2 (the index_maps already
    steered the right source block into VMEM)."""
    t = pl.program_id(2)                       # channel-block axis (innermost)
    sb = jnp.where(t < nv, t, t - nv)          # block index in v1 = [x1|x2]

    @pl.when(sb < n1)
    def _():
        o_ref[...] = x1_ref[...]

    @pl.when(sb >= n1)
    def _():
        o_ref[...] = x2_ref[...]


# --------------------------------------------------------------------------
# Wrapper.
# --------------------------------------------------------------------------
def cat_slice_cat(x1, x2, *, step_vmem_budget=None):
    """x1, x2: NCHW arrays with identical N, H, W (required by torch.cat dim=1)."""
    n, c1, h, w = x1.shape
    n2_, c2, h2, w2 = x2.shape
    assert (n, h, w) == (n2_, h2, w2), "cat(dim=1) needs matching N, H, W"

    # Match jnp/torch type-promotion semantics.
    out_dtype = jnp.promote_types(x1.dtype, x2.dtype)
    x1 = x1.astype(out_dtype)
    x2 = x2.astype(out_dtype)

    hw = h * w
    slice_c = min(SLICE_LIMIT, c1 + c2)    # channels taken by v1[:, 0:128]
    p1 = min(slice_c, c1)                  # portion of v3 coming from x1
    p2 = slice_c - p1                      # portion of v3 coming from x2
    c_out = c1 + c2 + slice_c

    itemsize = jnp.dtype(out_dtype).itemsize
    chans_per_step = c1 + c2 + c_out       # sublanes resident per lane per row
    bytes_per_lane = chans_per_step * itemsize

    step_budget, vmem_limit = _vmem_budgets()
    if step_vmem_budget is not None:
        step_budget = int(step_vmem_budget)

    x1f = x1.reshape(n, c1, hw)
    x2f = x2.reshape(n, c2, hw)
    out_shape = jax.ShapeDtypeStruct((n, c_out, hw), out_dtype)
    cparams = functools.partial(pltpu.CompilerParams, vmem_limit_bytes=vmem_limit)

    # ---------------------------------------------------------------------
    # Path B: channel-tiled fallback.  Triggered when a full-channel block
    # would blow the step budget even at the minimum 128-lane tile (huge C,
    # small H*W) — keeps the kernel usable on v7x's 64 MiB VMEM.
    # ---------------------------------------------------------------------
    if bytes_per_lane * min(hw, _LANE) > step_budget:
        hw_tile = hw if hw <= 4 * _LANE else 4 * _LANE     # lane-dense, ragged ok
        cc = _pick_channel_tile(c1, c2, hw_tile, itemsize, step_budget)
        if cc is not None:
            n1, n2b = c1 // cc, c2 // cc
            nv = n1 + n2b                       # channel blocks covering v1
            ns = pl.cdiv(slice_c, cc)           # channel blocks covering the slab
            num_hw = pl.cdiv(hw, hw_tile)

            # Channel-block axis is innermost so the clamped "unused" input
            # block index repeats across consecutive steps and its re-fetch is
            # skipped (negligible wasted HBM traffic).
            def x1_map(b, s, t):
                sb = jnp.where(t < nv, t, t - nv)
                return (b, jnp.minimum(sb, n1 - 1), s)

            def x2_map(b, s, t):
                sb = jnp.where(t < nv, t, t - nv)
                return (b, jnp.clip(sb - n1, 0, n2b - 1), s)

            def o_map(b, s, t):
                return (b, t, s)

            kernel = functools.partial(_channel_tiled_kernel, n1=n1, nv=nv)
            out = pl.pallas_call(
                kernel,
                out_shape=out_shape,
                grid_spec=pltpu.PrefetchScalarGridSpec(
                    num_scalar_prefetch=0,
                    grid=(n, num_hw, nv + ns),
                    in_specs=[
                        pl.BlockSpec((1, cc, hw_tile), x1_map),
                        pl.BlockSpec((1, cc, hw_tile), x2_map),
                    ],
                    out_specs=pl.BlockSpec((1, cc, hw_tile), o_map),
                ),
                compiler_params=cparams(
                    dimension_semantics=("parallel", "parallel", "arbitrary")),
            )(x1f, x2f)
            return out.reshape(n, c_out, h, w)
        # TODO(synk): gcd(c1, c2) has no sublane-aligned divisor -> cannot
        # channel-tile cleanly; fall through to the untiled path (best effort).

    # ---------------------------------------------------------------------
    # Path A: full-channel blocks, lane (H*W) + batch tiling.
    # ---------------------------------------------------------------------
    sub_pack = max(8, 32 // itemsize)
    misaligned = (c1 % sub_pack != 0) or ((c1 + c2) % sub_pack != 0) \
        or ((c1 + c2 + p1) % sub_pack != 0)
    # Narrow dtypes at non-packed channel offsets fragment the output DMA rows;
    # prefer wider lane tiles there.
    min_tile = 4 * _LANE if (itemsize < 4 and misaligned) else _LANE

    hw_tile = _pick_hw_tile(hw, bytes_per_lane, step_budget, min_tile=min_tile)
    num_hw = pl.cdiv(hw, hw_tile)
    nb = _pick_batch_block(n, bytes_per_lane * hw_tile, num_hw, step_budget)
    total_steps = (n // nb) * num_hw
    step_bytes = nb * bytes_per_lane * hw_tile

    kernel = functools.partial(_cat_slice_cat_kernel, c1=c1, c2=c2, p1=p1, p2=p2)

    def launch(buffer_count):
        def spec(shape, imap):
            if buffer_count > 2 and hasattr(pl, "Buffered"):
                try:
                    return pl.BlockSpec(shape, imap,
                                        pipeline_mode=pl.Buffered(buffer_count))
                except TypeError:
                    pass
            return pl.BlockSpec(shape, imap)

        return pl.pallas_call(
            kernel,
            out_shape=out_shape,
            grid_spec=pltpu.PrefetchScalarGridSpec(
                num_scalar_prefetch=0,
                grid=(n // nb, num_hw),
                in_specs=[
                    spec((nb, c1, hw_tile), lambda b, s: (b, 0, s)),
                    spec((nb, c2, hw_tile), lambda b, s: (b, 0, s)),
                ],
                out_specs=spec((nb, c_out, hw_tile), lambda b, s: (b, 0, s)),
            ),
            compiler_params=cparams(dimension_semantics=("parallel", "parallel")),
        )(x1f, x2f)

    # Short grids have no compute to hide DMA behind: request 3-deep buffering
    # when VMEM headroom clearly allows it; fall back to default buffering if
    # the runtime rejects it.
    want_deep = (total_steps < 8) and (3 * step_bytes <= (vmem_limit * 3) // 5)
    if want_deep and hasattr(pl, "Buffered"):
        try:
            out = launch(3)
        except Exception:
            out = launch(2)
    else:
        out = launch(2)
    return out.reshape(n, c_out, h, w)


def _reference(x1, x2):
    v1 = jnp.concatenate([x1, x2], axis=1)
    v2 = v1[:, 0:9223372036854775807]
    v3 = v2[:, 0:SLICE_LIMIT]
    return jnp.concatenate([v1, v3], axis=1)


if __name__ == "__main__":
    key = jax.random.PRNGKey(0)
    k1, k2, k3, k4, k5, k6 = jax.random.split(key, 6)

    # 1) Module-like shape: 128-channel inputs so the 0:128 slice is exercised
    #    exactly (torch.cat(dim=1) requires matching spatial dims, so both
    #    inputs use the same H, W).  Main path, opportunistic deep buffering.
    a1 = jax.random.normal(k1, (2, 128, 8, 16), dtype=jnp.float32)
    a2 = jax.random.normal(k2, (2, 128, 8, 16), dtype=jnp.float32)
    out = jax.block_until_ready(cat_slice_cat(a1, a2))
    ref = _reference(a1, a2)
    assert out.shape == ref.shape, (out.shape, ref.shape)
    assert jnp.array_equal(out, ref), "mismatch vs reference (main path, test 1)"

    # 2) Unequal channel counts (the 0:128 slice spans both inputs) and an
    #    H*W that is not a multiple of 128.  Main path.
    b1 = jax.random.normal(k3, (2, 96, 4, 5), dtype=jnp.float32)
    b2 = jax.random.normal(k4, (2, 48, 4, 5), dtype=jnp.float32)
    out = jax.block_until_ready(cat_slice_cat(b1, b2))
    ref = _reference(b1, b2)
    assert out.shape == ref.shape, (out.shape, ref.shape)
    assert jnp.array_equal(out, ref), "mismatch vs reference (main path, test 2)"

    # 3) Channel-tiled fallback path, forced with a tiny step budget (stands in
    #    for huge-C / small-HW shapes that would not fit VMEM on v7x).
    c1_in = jax.random.normal(k5, (1, 64, 4, 35), dtype=jnp.float32)
    c2_in = jax.random.normal(k6, (1, 64, 4, 35), dtype=jnp.float32)
    out = jax.block_until_ready(
        cat_slice_cat(c1_in, c2_in, step_vmem_budget=64 * 1024))
    ref = _reference(c1_in, c2_in)
    assert out.shape == ref.shape, (out.shape, ref.shape)
    assert jnp.array_equal(out, ref), "mismatch vs reference (channel-tiled path)"

    print("KERNEL_OK")
</pallas_src>

<mosaic_0001>
module attributes {stable_mosaic.version = 11 : i64} {
  func.func @_cat_slice_cat_kernel(%arg0: i32, %arg1: i32, %arg2: memref<1x128x128xf32, #tpu.memory_space<vmem>>, %arg3: memref<1x128x128xf32, #tpu.memory_space<vmem>>, %arg4: memref<1x384x128xf32, #tpu.memory_space<vmem>>) attributes {dimension_semantics = [#tpu.dimension_semantics<parallel>, #tpu.dimension_semantics<parallel>], iteration_bounds = array<i64: 2, 1>, scalar_prefetch = 0 : i64, scratch_operands = 0 : i64, tpu.core_type = #tpu.core_type<tc>, window_params = [{transform_indices = @transform_0, window_bounds = array<i64: 1, 128, 128>}, {transform_indices = @transform_1, window_bounds = array<i64: 1, 128, 128>}, {transform_indices = @transform_2, window_bounds = array<i64: 1, 384, 128>}]} {
    %c0 = arith.constant 0 : index
    %c0_0 = arith.constant 0 : index
    %c0_1 = arith.constant 0 : index
    %0 = vector.load %arg2[%c0, %c0_0, %c0_1] : memref<1x128x128xf32, #tpu.memory_space<vmem>>, vector<1x128x128xf32>
    %c0_2 = arith.constant 0 : index
    %c0_3 = arith.constant 0 : index
    %c0_4 = arith.constant 0 : index
    %1 = vector.load %arg4[%c0_2, %c0_3, %c0_4] : memref<1x384x128xf32, #tpu.memory_space<vmem>>, vector<1x128x128xf32>
    tpu.vector_store %arg4[%c0_2, %c0_3, %c0_4], %0 {strides = array<i32>} : memref<1x384x128xf32, #tpu.memory_space<vmem>>, vector<1x128x128xf32>,
    %c0_5 = arith.constant 0 : index
    %c0_6 = arith.constant 0 : index
    %c0_7 = arith.constant 0 : index
    %2 = vector.load %arg3[%c0_5, %c0_6, %c0_7] : memref<1x128x128xf32, #tpu.memory_space<vmem>>, vector<1x128x128xf32>
    %c0_8 = arith.constant 0 : index
    %c128 = arith.constant 128 : index
    %c0_9 = arith.constant 0 : index
    %3 = vector.load %arg4[%c0_8, %c128, %c0_9] : memref<1x384x128xf32, #tpu.memory_space<vmem>>, vector<1x128x128xf32>
    tpu.vector_store %arg4[%c0_8, %c128, %c0_9], %2 {strides = array<i32>} : memref<1x384x128xf32, #tpu.memory_space<vmem>>, vector<1x128x128xf32>,
    %c0_10 = arith.constant 0 : index
    %c0_11 = arith.constant 0 : index
    %c0_12 = arith.constant 0 : index
    %4 = vector.load %arg2[%c0_10, %c0_11, %c0_12] : memref<1x128x128xf32, #tpu.memory_space<vmem>>, vector<1x128x128xf32>
    %c0_13 = arith.constant 0 : index
    %c256 = arith.constant 256 : index
    %c0_14 = arith.constant 0 : index
    %5 = vector.load %arg4[%c0_13, %c256, %c0_14] : memref<1x384x128xf32, #tpu.memory_space<vmem>>, vector<1x128x128xf32>
    tpu.vector_store %arg4[%c0_13, %c256, %c0_14], %4 {strides = array<i32>} : memref<1x384x128xf32, #tpu.memory_space<vmem>>, vector<1x128x128xf32>,
    return
  }
  func.func @transform_0(%arg0: i32, %arg1: i32) -> (i32, i32, i32) {
    %c0_i32 = arith.constant 0 : i32
    %c0_i32_0 = arith.constant 0 : i32
    return %arg0, %c0_i32, %arg1 : i32, i32, i32
  }
  func.func @transform_1(%arg0: i32, %arg1: i32) -> (i32, i32, i32) {
    %c0_i32 = arith.constant 0 : i32
    %c0_i32_0 = arith.constant 0 : i32
    return %arg0, %c0_i32, %arg1 : i32, i32, i32
  }
  func.func @transform_2(%arg0: i32, %arg1: i32) -> (i32, i32, i32) {
    %c0_i32 = arith.constant 0 : i32
    %c0_i32_0 = arith.constant 0 : i32
    return %arg0, %c0_i32, %arg1 : i32, i32, i32
  }
}

</mosaic_0001>

<llo_original>
// kernel: tpu_custom_call.1
$region0: #{tpu_custom_call.1}
  #allocation0 [shape = 'u32[]', space=smem, size = 0x4, offset = 0x4, fixed_abs, tag = 'smem constant byte address 0x4 - core index']
  #allocation1 [shape = 'u32[144,128]{1,0:T(1,128)}', space=vmem, size = 0x12000, scoped, tag = 'internal scratch']
  %s0 = inlined_call_operand.hbm [shape: f32[2,128,128], index: 0, kind: input, shape index: {}]
  %s1 = inlined_call_operand.hbm [shape: f32[2,128,128], index: 1, kind: input, shape index: {}]
  %s2 = inlined_call_operand.hbm [shape: f32[2,384,128], index: 2, kind: output, shape index: {}]
  %s3 = sld [smem:[#allocation0]]
  $region49: #{tpu_custom_call.1} parent=0
    _
  %s5 = ssub.s32 1, %s3
  %s6 = scalar_select 0, %s5, %s3
  $region1: #{tpu_custom_call.1} parent=0
    #allocation2 [shape = 'u8[131072]{0}', space=vmem, size = 0x20000, scoped, tag = 'input window, operand 0']
    #allocation3 [shape = 's32[2]{0}', space=sflag, size = 0x8, scoped, tag = 'scoped memory for tpu_custom_call.1']
    #allocation4 [shape = 's32[2]{0}', space=sflag, size = 0x8, scoped, tag = 'scoped memory for tpu_custom_call.1']
    #allocation5 [shape = 'u8[131072]{0}', space=vmem, size = 0x20000, scoped, tag = 'input window, operand 1']
    #allocation6 [shape = 's32[2]{0}', space=sflag, size = 0x8, scoped, tag = 'scoped memory for tpu_custom_call.1']
    #allocation7 [shape = 'u8[393216]{0}', space=vmem, size = 0x60000, scoped, tag = 'output window, operand 0']
    %7 = vsyncpa [#allocation3], 0
    %s8 = scalar_lea.sflag [#allocation3], 1
    %9 = vsyncpa %s8, 0
    %10 = vsyncpa [#allocation6], 0
    %s11 = scalar_lea.sflag [#allocation6], 1
    %12 = vsyncpa %s11, 0
    %13 = vsyncpa [#allocation4], 0
    %s14 = scalar_lea.sflag [#allocation4], 1
    %15 = vsyncpa %s14, 0
    loop: start=0, step=1, limit=4
    $region2: #{tpu_custom_call.1} parent=1 // loop_pre_header
      _
    $region3: #{tpu_custom_call.1} parent=1 // loop_header
      %s17 = sphi 0, %s21
      %p18 = scmp.ge.s32.totalorder %s17, 4
      %s24 = sphi 0, %s36
      %s25 = sphi 0, %s32
      %s26 = sphi 0, %s24
      %s27 = sphi 0, %s25
      %s28 = sphi 0, %s26
      %s29 = sphi 0, %s27
      %s41 = sphi 0, %s43
      %s44 = sphi 0, %s41
      %s45 = sphi 0, %s44
      %s61 = sphi 0, %s45
      %s69 = sphi 0, %s71
      %s72 = sphi 0, %s69
      %s73 = sphi 0, %s72
      %s89 = sphi 0, %s73
      %s97 = sphi 0, %s99
      %s100 = sphi 0, %s97
      %s101 = sphi 0, %s100
      %s117 = sphi 0, %s101
    $region4: #{tpu_custom_call.1} parent=1 // loop_header_branch
      %20 = sbr.rel (%p18) target = $region8
    $region5: #{tpu_custom_call.1} parent=1 // loop_body
      %s22 = ssub.s32 %s17, 1
      %s23 = ssub.s32 %s17, 2
      %s30 = sadd.s32 1, %s25
      %p31 = scmp.ge.s32.totalorder %s30, 1
      %s32 = scalar_select %p31, 0, %s30
      %s33 = sadd.s32 1, %s24
      %s34 = scalar_select %p31, %s33, %s24
      %p35 = scmp.ge.s32.totalorder %s34, 2
      %s36 = scalar_select %p35, 0, %s34
      %s37 = ssub.s32 %s24, %s36
      %s38 = ssub.s32 %s25, %s32
      %s39 = sor.u32 %s37, %s38
      %p40 = scmp.eq.s32.totalorder %s39, 0
      %s42 = sadd.s32 %s41, 1
      %s43 = scalar_select %p40, %s41, %s42
      %p46 = pneg %p40
      %p47 = scmp.eq.s32.totalorder %s17, 1
      %p48 = por %p46, %p47
      %p49 = scmp.ne.s32.totalorder %s41, %s44
      %p50 = scmp.eq.s32.totalorder %s17, 0
      %p51 = por %p49, %p50
      %p52 = scmp.ne.s32.totalorder %s41, %s44
      %p53 = scmp.eq.s32.totalorder %s22, 1
      %p54 = por %p52, %p53
      %p55 = scmp.ne.s32.totalorder %s44, %s45
      %p56 = scmp.eq.s32.totalorder %s22, 0
      %p57 = por %p55, %p56
      %p58 = scmp.ne.s32.totalorder %s44, %s45
      %p59 = scmp.eq.s32.totalorder %s23, 1
      %p60 = por %p58, %p59
      %p62 = scmp.ne.s32.totalorder %s45, %s61
      %p63 = scmp.eq.s32.totalorder %s23, 0
      %p64 = por %p62, %p63
      %s65 = ssub.s32 %s24, %s36
      %s66 = ssub.s32 %s25, %s32
      %s67 = sor.u32 %s65, %s66
      %p68 = scmp.eq.s32.totalorder %s67, 0
      %s70 = sadd.s32 %s69, 1
      %s71 = scalar_select %p68, %s69, %s70
      %p74 = pneg %p68
      %p75 = scmp.eq.s32.totalorder %s17, 1
      %p76 = por %p74, %p75
      %p77 = scmp.ne.s32.totalorder %s69, %s72
      %p78 = scmp.eq.s32.totalorder %s17, 0
      %p79 = por %p77, %p78
      %p80 = scmp.ne.s32.totalorder %s69, %s72
      %p81 = scmp.eq.s32.totalorder %s22, 1
      %p82 = por %p80, %p81
      %p83 = scmp.ne.s32.totalorder %s72, %s73
      %p84 = scmp.eq.s32.totalorder %s22, 0
      %p85 = por %p83, %p84
      %p86 = scmp.ne.s32.totalorder %s72, %s73
      %p87 = scmp.eq.s32.totalorder %s23, 1
      %p88 = por %p86, %p87
      %p90 = scmp.ne.s32.totalorder %s73, %s89
      %p91 = scmp.eq.s32.totalorder %s23, 0
      %p92 = por %p90, %p91
      %s93 = ssub.s32 %s24, %s36
      %s94 = ssub.s32 %s25, %s32
      %s95 = sor.u32 %s93, %s94
      %p96 = scmp.eq.s32.totalorder %s95, 0
      %s98 = sadd.s32 %s97, 1
      %s99 = scalar_select %p96, %s97, %s98
      %p102 = pneg %p96
      %p103 = scmp.eq.s32.totalorder %s17, 1
      %p104 = por %p102, %p103
      %p105 = scmp.ne.s32.totalorder %s97, %s100
      %p106 = scmp.eq.s32.totalorder %s17, 0
      %p107 = por %p105, %p106
      %p108 = scmp.ne.s32.totalorder %s97, %s100
      %p109 = scmp.eq.s32.totalorder %s22, 1
      %p110 = por %p108, %p109
      %p111 = scmp.ne.s32.totalorder %s100, %s101
      %p112 = scmp.eq.s32.totalorder %s22, 0
      %p113 = por %p111, %p112
      %p114 = scmp.ne.s32.totalorder %s100, %s101
      %p115 = scmp.eq.s32.totalorder %s23, 1
      %p116 = por %p114, %p115
      %p118 = scmp.ne.s32.totalorder %s101, %s117
      %p119 = scmp.eq.s32.totalorder %s23, 0
      %p120 = por %p118, %p119
      %p121 = scmp.le.s32.totalorder 1, %s17
      %p122 = scmp.lt.s32.totalorder %s17, 3
      %p123 = pnand %p121, %p122
      %p124 = pneg %p123
      // Predicated region
      $region9: #{tpu_custom_call.1} parent=5 // pred_check
        _
      $region10: #{tpu_custom_call.1} parent=5 // pred_check_branch
        %126 = sbr.rel (%p123) target = $region12
      $region11: #{tpu_custom_call.1} parent=5 // pred_region
        %s127 = ssub.s32 %s17, 1
      $region12: #{tpu_custom_call.1} parent=5 // pred_fallthru
        _
      %p128 = scmp.lt.s32.totalorder %s17, 2
      // Predicated region
      $region13: #{tpu_custom_call.1} parent=5 // pred_check
        %p129 = pneg %p128
      $region14: #{tpu_custom_call.1} parent=5 // pred_check_branch
        %131 = sbr.rel (%p129) target = $region16
      $region15: #{tpu_custom_call.1} parent=5 // pred_region
        // Predicated region
        $region17: #{tpu_custom_call.1} parent=15 // pred_check
          %p132 = pneg %p51
        $region18: #{tpu_custom_call.1} parent=15 // pred_check_branch
          %134 = sbr.rel (%p132) target = $region20
        $region19: #{tpu_custom_call.1} parent=15 // pred_region
          %s135 = sand.u32 %s41, 1
          %s136 = scalar_lea.sflag [#allocation3], %s135
          %s137 = sand.u32 %s41, 1
          %s138 = smul.addr %s137, 128
          %s139 = scalar_lea.vmem [#allocation2], %s138
          %s141 = ssub.s32 2048, 2048
          %142 = vsyncadd %s136, %s141
          %s143 = smul.addr %s24, 16
          %s144 = sadd.s32 %s25, %s143
          %s145 = smul.addr %s144, 128
          %s146 = scalar_lea.hbm %s0, %s145
          %s147 = sshll.u32 %s139, 4
          %s148 = int_to_ptr.vmem [resolvable:$true] %s147
          %153 = dma.hbm_to_vmem [thread:$0]  %s146, 2048, %s148, %s136, 128, 128, 8
        $region20: #{tpu_custom_call.1} parent=15 // pred_fallthru
          _
        // Predicated region
        $region21: #{tpu_custom_call.1} parent=15 // pred_check
          %p154 = pneg %p79
        $region22: #{tpu_custom_call.1} parent=15 // pred_check_branch
          %156 = sbr.rel (%p154) target = $region24
        $region23: #{tpu_custom_call.1} parent=15 // pred_region
          %s157 = sand.u32 %s69, 1
          %s158 = scalar_lea.sflag [#allocation6], %s157
          %s159 = sand.u32 %s69, 1
          %s160 = smul.addr %s159, 128
          %s161 = scalar_lea.vmem [#allocation5], %s160
          %s163 = ssub.s32 2048, 2048
          %164 = vsyncadd %s158, %s163
          %s165 = smul.addr %s24, 16
          %s166 = sadd.s32 %s25, %s165
          %s167 = smul.addr %s166, 128
          %s168 = scalar_lea.hbm %s1, %s167
          %s169 = sshll.u32 %s161, 4
          %s170 = int_to_ptr.vmem [resolvable:$true] %s169
          %175 = dma.hbm_to_vmem [thread:$0]  %s168, 2048, %s170, %s158, 128, 128, 8
        $region24: #{tpu_custom_call.1} parent=15 // pred_fallthru
          _
      $region16: #{tpu_custom_call.1} parent=5 // pred_fallthru
        _
      %p176 = scmp.le.s32.totalorder 1, %s17
      %p177 = scmp.lt.s32.totalorder %s17, 3
      %p178 = pnand %p176, %p177
      %p179 = pneg %p178
      // Predicated region
      $region25: #{tpu_custom_call.1} parent=5 // pred_check
        _
      $region26: #{tpu_custom_call.1} parent=5 // pred_check_branch
        %181 = sbr.rel (%p178) target = $region28
      $region27: #{tpu_custom_call.1} parent=5 // pred_region
        %s182 = ssub.s32 %s17, 1
        %s183 = sand.u32 %s44, 1
        %s184 = scalar_lea.sflag [#allocation3], %s183
        %s185 = sand.u32 %s44, 1
        %s186 = smul.addr %s185, 128
        %s187 = scalar_lea.vmem [#allocation2], %s186
        // Predicated region
        $region29: #{tpu_custom_call.1} parent=27 // pred_check
          %p188 = pneg %p57
        $region30: #{tpu_custom_call.1} parent=27 // pred_check_branch
          %190 = sbr.rel (%p188) target = $region32
        $region31: #{tpu_custom_call.1} parent=27 // pred_region
          %191 = dma.done %s184, 2048
        $region32: #{tpu_custom_call.1} parent=27 // pred_fallthru
          _
        %s192 = sand.u32 %s72, 1
        %s193 = scalar_lea.sflag [#allocation6], %s192
        %s194 = sand.u32 %s72, 1
        %s195 = smul.addr %s194, 128
        %s196 = scalar_lea.vmem [#allocation5], %s195
        // Predicated region
        $region33: #{tpu_custom_call.1} parent=27 // pred_check
          %p197 = pneg %p85
        $region34: #{tpu_custom_call.1} parent=27 // pred_check_branch
          %199 = sbr.rel (%p197) target = $region36
        $region35: #{tpu_custom_call.1} parent=27 // pred_region
          %200 = dma.done %s193, 2048
        $region36: #{tpu_custom_call.1} parent=27 // pred_fallthru
          _
        %s201 = sand.u32 %s44, 1
        %s202 = scalar_lea.sflag [#allocation3], %s201
        %s203 = sand.u32 %s44, 1
        %s204 = smul.addr %s203, 128
        %s205 = scalar_lea.vmem [#allocation2], %s204
        %p206 = pneg %p57
        %p207 = pneg %p54
        %s208 = sand.u32 %s72, 1
        %s209 = scalar_lea.sflag [#allocation6], %s208
        %s210 = sand.u32 %s72, 1
        %s211 = smul.addr %s210, 128
        %s212 = scalar_lea.vmem [#allocation5], %s211
        %p213 = pneg %p85
        %p214 = pneg %p82
        %p215 = pneg %p113
        %p216 = pneg %p110
        %s217 = sand.u32 %s100, 1
        %s218 = scalar_lea.sflag [#allocation4], %s217
        %s219 = sand.u32 %s100, 1
        %s220 = smul.addr %s219, 384
        %s221 = scalar_lea.vmem [#allocation7], %s220
        %v222 = vld [vmem:[%s187] sm:$0xff]
        %v223 = vld [vmem:[%s187 + $0x8] sm:$0xff]
        %v224 = vld [vmem:[%s187 + $0x10] sm:$0xff]
        %v225 = vld [vmem:[%s187 + $0x18] sm:$0xff]
        %v226 = vld [vmem:[%s187 + $0x20] sm:$0xff]
        %v227 = vld [vmem:[%s187 + $0x28] sm:$0xff]
        %v228 = vld [vmem:[%s187 + $0x30] sm:$0xff]
        %v229 = vld [vmem:[%s187 + $0x38] sm:$0xff]
        %v230 = vld [vmem:[%s187 + $0x40] sm:$0xff]
        %v231 = vld [vmem:[%s187 + $0x48] sm:$0xff]
        %v232 = vld [vmem:[%s187 + $0x50] sm:$0xff]
        %v233 = vld [vmem:[%s187 + $0x58] sm:$0xff]
        %v234 = vld [vmem:[%s187 + $0x60] sm:$0xff]
        %v235 = vld [vmem:[%s187 + $0x68] sm:$0xff]
        %v236 = vld [vmem:[%s187 + $0x70] sm:$0xff]
        %v237 = vld [vmem:[%s187 + $0x78] sm:$0xff]
        %238 = vst [vmem:[%s221] sm:$0xff] %v222
        %239 = vst [vmem:[%s221 + $0x8] sm:$0xff] %v223
        %240 = vst [vmem:[%s221 + $0x10] sm:$0xff] %v224
        %241 = vst [vmem:[%s221 + $0x18] sm:$0xff] %v225
        %242 = vst [vmem:[%s221 + $0x20] sm:$0xff] %v226
        %243 = vst [vmem:[%s221 + $0x28] sm:$0xff] %v227
        %244 = vst [vmem:[%s221 + $0x30] sm:$0xff] %v228
        %245 = vst [vmem:[%s221 + $0x38] sm:$0xff] %v229
        %246 = vst [vmem:[%s221 + $0x40] sm:$0xff] %v230
        %247 = vst [vmem:[%s221 + $0x48] sm:$0xff] %v231
        %248 = vst [vmem:[%s221 + $0x50] sm:$0xff] %v232
        %249 = vst [vmem:[%s221 + $0x58] sm:$0xff] %v233
        %250 = vst [vmem:[%s221 + $0x60] sm:$0xff] %v234
        %251 = vst [vmem:[%s221 + $0x68] sm:$0xff] %v235
        %252 = vst [vmem:[%s221 + $0x70] sm:$0xff] %v236
        %253 = vst [vmem:[%s221 + $0x78] sm:$0xff] %v237
        %v254 = vld [vmem:[%s196] sm:$0xff]
        %v255 = vld [vmem:[%s196 + $0x8] sm:$0xff]
        %v256 = vld [vmem:[%s196 + $0x10] sm:$0xff]
        %v257 = vld [vmem:[%s196 + $0x18] sm:$0xff]
        %v258 = vld [vmem:[%s196 + $0x20] sm:$0xff]
        %v259 = vld [vmem:[%s196 + $0x28] sm:$0xff]
        %v260 = vld [vmem:[%s196 + $0x30] sm:$0xff]
        %v261 = vld [vmem:[%s196 + $0x38] sm:$0xff]
        %v262 = vld [vmem:[%s196 + $0x40] sm:$0xff]
        %v263 = vld [vmem:[%s196 + $0x48] sm:$0xff]
        %v264 = vld [vmem:[%s196 + $0x50] sm:$0xff]
        %v265 = vld [vmem:[%s196 + $0x58] sm:$0xff]
        %v266 = vld [vmem:[%s196 + $0x60] sm:$0xff]
        %v267 = vld [vmem:[%s196 + $0x68] sm:$0xff]
        %v268 = vld [vmem:[%s196 + $0x70] sm:$0xff]
        %v269 = vld [vmem:[%s196 + $0x78] sm:$0xff]
        %270 = vst [vmem:[%s221 + $0x80] sm:$0xff] %v254
        %271 = vst [vmem:[%s221 + $0x88] sm:$0xff] %v255
        %272 = vst [vmem:[%s221 + $0x90] sm:$0xff] %v256
        %273 = vst [vmem:[%s221 + $0x98] sm:$0xff] %v257
        %274 = vst [vmem:[%s221 + $0xa0] sm:$0xff] %v258
        %275 = vst [vmem:[%s221 + $0xa8] sm:$0xff] %v259
        %276 = vst [vmem:[%s221 + $0xb0] sm:$0xff] %v260
        %277 = vst [vmem:[%s221 + $0xb8] sm:$0xff] %v261
        %278 = vst [vmem:[%s221 + $0xc0] sm:$0xff] %v262
        %279 = vst [vmem:[%s221 + $0xc8] sm:$0xff] %v263
        %280 = vst [vmem:[%s221 + $0xd0] sm:$0xff] %v264
        %281 = vst [vmem:[%s221 + $0xd8] sm:$0xff] %v265
        %282 = vst [vmem:[%s221 + $0xe0] sm:$0xff] %v266
        %283 = vst [vmem:[%s221 + $0xe8] sm:$0xff] %v267
        %284 = vst [vmem:[%s221 + $0xf0] sm:$0xff] %v268
        %285 = vst [vmem:[%s221 + $0xf8] sm:$0xff] %v269
        %v286 = vld [vmem:[%s187] sm:$0xff]
        %v287 = vld [vmem:[%s187 + $0x8] sm:$0xff]
        %v288 = vld [vmem:[%s187 + $0x10] sm:$0xff]
        %v289 = vld [vmem:[%s187 + $0x18] sm:$0xff]
        %v290 = vld [vmem:[%s187 + $0x20] sm:$0xff]
        %v291 = vld [vmem:[%s187 + $0x28] sm:$0xff]
        %v292 = vld [vmem:[%s187 + $0x30] sm:$0xff]
        %v293 = vld [vmem:[%s187 + $0x38] sm:$0xff]
        %v294 = vld [vmem:[%s187 + $0x40] sm:$0xff]
        %v295 = vld [vmem:[%s187 + $0x48] sm:$0xff]
        %v296 = vld [vmem:[%s187 + $0x50] sm:$0xff]
        %v297 = vld [vmem:[%s187 + $0x58] sm:$0xff]
        %v298 = vld [vmem:[%s187 + $0x60] sm:$0xff]
        %v299 = vld [vmem:[%s187 + $0x68] sm:$0xff]
        %v300 = vld [vmem:[%s187 + $0x70] sm:$0xff]
        %v301 = vld [vmem:[%s187 + $0x78] sm:$0xff]
        %302 = vst [vmem:[%s221 + $0x100] sm:$0xff] %v286
        %303 = vst [vmem:[%s221 + $0x108] sm:$0xff] %v287
        %304 = vst [vmem:[%s221 + $0x110] sm:$0xff] %v288
        %305 = vst [vmem:[%s221 + $0x118] sm:$0xff] %v289
        %306 = vst [vmem:[%s221 + $0x120] sm:$0xff] %v290
        %307 = vst [vmem:[%s221 + $0x128] sm:$0xff] %v291
        %308 = vst [vmem:[%s221 + $0x130] sm:$0xff] %v292
        %309 = vst [vmem:[%s221 + $0x138] sm:$0xff] %v293
        %310 = vst [vmem:[%s221 + $0x140] sm:$0xff] %v294
        %311 = vst [vmem:[%s221 + $0x148] sm:$0xff] %v295
        %312 = vst [vmem:[%s221 + $0x150] sm:$0xff] %v296
        %313 = vst [vmem:[%s221 + $0x158] sm:$0xff] %v297
        %314 = vst [vmem:[%s221 + $0x160] sm:$0xff] %v298
        %315 = vst [vmem:[%s221 + $0x168] sm:$0xff] %v299
        %316 = vst [vmem:[%s221 + $0x170] sm:$0xff] %v300
        %317 = vst [vmem:[%s221 + $0x178] sm:$0xff] %v301
        %s318 = sand.u32 %s100, 1
        %s319 = scalar_lea.sflag [#allocation4], %s318
        %s320 = sand.u32 %s100, 1
        %s321 = smul.addr %s320, 384
        %s322 = scalar_lea.vmem [#allocation7], %s321
        // Predicated region
        $region37: #{tpu_custom_call.1} parent=27 // pred_check
          %p323 = pneg %p110
        $region38: #{tpu_custom_call.1} parent=27 // pred_check_branch
          %325 = sbr.rel (%p323) target = $region40
        $region39: #{tpu_custom_call.1} parent=27 // pred_region
          %s327 = ssub.s32 6144, 6144
          %328 = vsyncadd %s319, %s327
          %s329 = smul.addr %s26, 48
          %s330 = sadd.s32 %s27, %s329
          %s331 = smul.addr %s330, 128
          %s332 = scalar_lea.hbm %s2, %s331
          %s333 = sshll.u32 %s322, 4
          %s334 = int_to_ptr.vmem [resolvable:$true] %s333
          %339 = dma.vmem_to_hbm [thread:$0]  %s334, 6144, %s332, %s319, 128, 128, 8
        $region40: #{tpu_custom_call.1} parent=27 // pred_fallthru
          _
      $region28: #{tpu_custom_call.1} parent=5 // pred_fallthru
        _
      %p340 = scmp.le.s32.totalorder 2, %s17
      // Predicated region
      $region41: #{tpu_custom_call.1} parent=5 // pred_check
        %p341 = pneg %p340
      $region42: #{tpu_custom_call.1} parent=5 // pred_check_branch
        %343 = sbr.rel (%p341) target = $region44
      $region43: #{tpu_custom_call.1} parent=5 // pred_region
        %s344 = ssub.s32 %s17, 2
        // Predicated region
        $region45: #{tpu_custom_call.1} parent=43 // pred_check
          %p345 = pneg %p116
        $region46: #{tpu_custom_call.1} parent=43 // pred_check_branch
          %347 = sbr.rel (%p345) target = $region48
        $region47: #{tpu_custom_call.1} parent=43 // pred_region
          %s348 = sand.u32 %s101, 1
          %s349 = scalar_lea.sflag [#allocation4], %s348
          %s350 = sand.u32 %s101, 1
          %s351 = smul.addr %s350, 384
          %s352 = scalar_lea.vmem [#allocation7], %s351
          %353 = dma.done %s349, 6144
        $region48: #{tpu_custom_call.1} parent=43 // pred_fallthru
          _
      $region44: #{tpu_custom_call.1} parent=5 // pred_fallthru
        _
    $region6: #{tpu_custom_call.1} parent=1 // loop_footer
      %s21 = sadd.s32 1, %s17
    $region7: #{tpu_custom_call.1} parent=1 // loop_footer_branch
      %16 = sbr.rel target = $region3
    $region8: #{tpu_custom_call.1} parent=1 // loop_exit
      _
    %354 = vsyncpa [#allocation3], 1
    %s355 = scalar_lea.sflag [#allocation3], 1
    %356 = vsyncpa %s355, 1
    %357 = vsyncpa [#allocation6], 1
    %s358 = scalar_lea.sflag [#allocation6], 1
    %359 = vsyncpa %s358, 1
    %360 = vsyncpa [#allocation4], 1
    %s361 = scalar_lea.sflag [#allocation4], 1
    %362 = vsyncpa %s361, 1

</llo_original>
